<compile_context>
chip_gen: v5e
topology: v5e:2x2
jax: 0.10.0
libtpu: 0.0.40
codegen_flags: <defaults>
</compile_context>

<pallas_src>
import functools

import jax
import jax.numpy as jnp
from jax.experimental import pallas as pl
from jax.experimental.pallas import tpu as pltpu


# -----------------------------------------------------------------------------
# k=3 zero-padded conv across the channel axis + sigmoid (tiny, O(B*C)).
# -----------------------------------------------------------------------------
def _conv3_sigmoid(m, w_ref, b_ref):
    """m: (B, C) f32; w_ref: SMEM (3,), b_ref: SMEM (1,).

    out[c] = w0*m[c-1] + w1*m[c] + w2*m[c+1] + bias   (zero padded ends)
    """
    C = m.shape[-1]
    ax = m.ndim - 1
    idx = jax.lax.broadcasted_iota(jnp.int32, m.shape, ax)
    # pltpu.roll needs a non-negative shift: rolling by C-1 == rolling by -1.
    m_left = jnp.where(idx == 0, 0.0, pltpu.roll(m, shift=1, axis=ax))          # m[c-1]
    m_right = jnp.where(idx == C - 1, 0.0, pltpu.roll(m, shift=C - 1, axis=ax))  # m[c+1]
    y = w_ref[0] * m_left + w_ref[1] * m + w_ref[2] * m_right + b_ref[0]
    return jax.nn.sigmoid(y)


# -----------------------------------------------------------------------------
# Small / grid-less fused path.
# -----------------------------------------------------------------------------
def _small_kernel(w_ref, b_ref, x_ref, o_ref):
    x = x_ref[...].astype(jnp.float32)                 # (B, C, L)
    m = jnp.mean(x, axis=-1)                           # (B, C)
    o_ref[...] = _conv3_sigmoid(m, w_ref, b_ref).astype(o_ref.dtype)


# -----------------------------------------------------------------------------
# Tiny epilogue kernel for the tiled path: conv + sigmoid on the (B, C) means.
# -----------------------------------------------------------------------------
def _conv_kernel(w_ref, b_ref, m_ref, o_ref):
    m = m_ref[...].astype(jnp.float32)                 # (B, C)
    o_ref[...] = _conv3_sigmoid(m, w_ref, b_ref).astype(o_ref.dtype)


# -----------------------------------------------------------------------------
# Streaming mean over L of the flattened (R=B*C, L) view.
#   grid = (row_tiles, L_tiles); x block (TR, TL); output (TR, 1) f32 means.
#   acc_ref: (TR, ACC_W) f32, ACC_W = min(TL, 128) -> lane-dense VPU adds; the
#   cross-lane reduce happens once, in the last-L-tile epilogue.
# -----------------------------------------------------------------------------
def _mean_kernel(x_ref, o_ref, acc_ref, *, tl, acc_w, l_total, ragged):
    li = pl.program_id(1)

    @pl.when(li == 0)
    def _():
        acc_ref[...] = jnp.zeros_like(acc_ref)

    if ragged:
        valid = l_total - li * tl      # columns >= valid are OOB garbage (last tile)

    for j in range(tl // acc_w):       # static unroll, <= 128 lane chunks
        chunk = x_ref[:, j * acc_w:(j + 1) * acc_w].astype(jnp.float32)
        if ragged:
            col = j * acc_w + jax.lax.broadcasted_iota(jnp.int32, chunk.shape, 1)
            chunk = jnp.where(col < valid, chunk, 0.0)
        acc_ref[...] += chunk          # pure VPU adds, accumulator stays in VMEM

    @pl.when(li == pl.num_programs(1) - 1)
    def _():
        s = jnp.sum(acc_ref[...], axis=-1, keepdims=True)     # single XLU reduce
        o_ref[...] = (s * (1.0 / float(l_total))).astype(o_ref.dtype)


# -----------------------------------------------------------------------------
# Tile sizing: target bytes-per-grid-step, not a fixed TL cap.
# -----------------------------------------------------------------------------
def _vmem_capacity_bytes(default=64 << 20):
    try:
        return int(pltpu.get_tpu_info().vmem_capacity_bytes)
    except Exception:
        return default     # conservative (v7x per-TensorCore VMEM)


def _choose_tiles(n_rows, length, itemsize, *, target_bytes,
                  max_lane_chunks=128, min_split_bytes=256 * 1024):
    """Pick (row_tile, lane_tile) for streaming a (n_rows, length) array.

    lane_tile: multiple of 128 (or full length when < 128); row_tile: multiple
    of 8 (or full n_rows when < 8).  Blocks are sized toward `target_bytes`
    per grid step (keeps the ~0.35us/step overhead negligible) while capping
    the unrolled in-kernel lane-chunk count.  Prefers >= 2 row tiles so v7x's
    two TensorCores both get work on the "parallel" axis.
    """
    target_bytes = max(int(target_bytes), 128 * 8 * itemsize)
    if length < 128:
        tl = length
    else:
        rows_min = min(8, n_rows)
        budget = max(1, target_bytes // (itemsize * rows_min * 128))
        tl = 128 * int(min(length // 128, max_lane_chunks, budget))
    if n_rows <= 8:
        tr = n_rows
    else:
        tr = int(max(8, (target_bytes // (itemsize * tl)) // 8 * 8))
        tr = min(tr, (n_rows // 8) * 8)
        if tr >= n_rows:
            # A single row tile would idle one v7x core; split if each step
            # still moves a reasonable number of bytes.
            half = (((n_rows + 1) // 2) + 7) // 8 * 8
            if half < n_rows and half * tl * itemsize >= min_split_bytes:
                tr = half
    return tr, tl


# -----------------------------------------------------------------------------
# Public wrapper.
# -----------------------------------------------------------------------------
def labelaware_forward(x, w, b, *, small_threshold_bytes=4 << 20,
                       force_tiled=False, target_block_bytes=4 << 20):
    """x: (B, C, L); w: (3,) f32; b: (1,) f32 -> (B, C) in x.dtype."""
    B, C, L = x.shape
    itemsize = x.dtype.itemsize
    x_bytes = x.size * itemsize

    smem = pl.BlockSpec(memory_space=pltpu.MemorySpace.SMEM)
    vmem = pl.BlockSpec(memory_space=pltpu.MemorySpace.VMEM)

    if not force_tiled and x_bytes <= small_threshold_bytes:
        # Whole problem in one VMEM block; fits comfortably under every
        # generation's default scoped-VMEM limit, so no override needed.
        return pl.pallas_call(
            _small_kernel,
            out_shape=jax.ShapeDtypeStruct((B, C), x.dtype),
            in_specs=[smem, smem, vmem],
            out_specs=vmem,
            cost_estimate=pl.CostEstimate(
                flops=2 * B * C * L + 6 * B * C,
                transcendentals=B * C,
                bytes_accessed=x_bytes + B * C * itemsize),
        )(w, b, x)

    # --- Tiled streaming-mean path over the flattened (B*C, L) view. ---
    R = B * C
    xr = x.reshape(R, L)                      # contiguous -> free reshape

    # Cap per-step block at 4 MiB so 2x double-buffered x fits v5e's 16 MiB
    # default scoped VMEM (and leaves headroom on v7x's 64 MiB physical VMEM).
    target = min(int(target_block_bytes), 4 << 20)
    tr, tl = _choose_tiles(R, L, itemsize, target_bytes=target)
    acc_w = min(tl, 128)
    grid_r = pl.cdiv(R, tr)
    grid_l = pl.cdiv(L, tl)
    ragged = (L % tl) != 0

    block_bytes = tr * tl * itemsize
    vmem_needed = 2 * block_bytes + tr * acc_w * 4 + 2 * tr * 4 + (4 << 20)
    vmem_cap = _vmem_capacity_bytes() - (8 << 20)
    vmem_limit = int(max(16 << 20, min(vmem_needed, vmem_cap)))

    mean_kernel = functools.partial(
        _mean_kernel, tl=tl, acc_w=acc_w, l_total=L, ragged=ragged)

    means = pl.pallas_call(
        mean_kernel,
        out_shape=jax.ShapeDtypeStruct((R, 1), jnp.float32),
        grid_spec=pltpu.PrefetchScalarGridSpec(
            num_scalar_prefetch=0,
            grid=(grid_r, grid_l),
            in_specs=[pl.BlockSpec((tr, tl), lambda ri, li: (ri, li))],
            out_specs=pl.BlockSpec((tr, 1), lambda ri, li: (ri, 0)),
            scratch_shapes=[pltpu.VMEM((tr, acc_w), jnp.float32)],
        ),
        compiler_params=pltpu.CompilerParams(
            dimension_semantics=("parallel", "arbitrary"),
            vmem_limit_bytes=vmem_limit,
        ),
        cost_estimate=pl.CostEstimate(
            flops=2 * R * L, transcendentals=0,
            bytes_accessed=x_bytes + R * 4),
    )(xr)

    means = means.reshape(B, C)

    # TODO(synk): if the v7x trace shows exposed DMA between steps even at 4 MiB
    # blocks, add pipeline_mode=pl.Buffered(3) to the x BlockSpec above.
    return pl.pallas_call(
        _conv_kernel,
        out_shape=jax.ShapeDtypeStruct((B, C), x.dtype),
        in_specs=[smem, smem, vmem],
        out_specs=vmem,
        cost_estimate=pl.CostEstimate(
            flops=6 * B * C, transcendentals=B * C,
            bytes_accessed=B * C * (4 + itemsize)),
    )(w, b, means)


def labelaware_reference(x, w, b):
    """Pure-JAX reference mirroring the PyTorch forward."""
    m = jnp.mean(x.astype(jnp.float32), axis=-1)       # (B, C)
    mp = jnp.pad(m, ((0, 0), (1, 1)))                  # zero pad channel axis
    y = w[0] * mp[:, :-2] + w[1] * mp[:, 1:-1] + w[2] * mp[:, 2:] + b[0]
    return jax.nn.sigmoid(y).astype(x.dtype)


if __name__ == "__main__":
    key = jax.random.PRNGKey(0)
    kx, kw, kb, k2, k3, k4 = jax.random.split(key, 6)

    # Deterministic Conv1d(1, 1, k=3) parameters (PyTorch default init range:
    # U(-1/sqrt(fan_in), 1/sqrt(fan_in)) with fan_in = in_channels * k = 3).
    bound = 1.0 / jnp.sqrt(3.0)
    w = jax.random.uniform(kw, (3,), jnp.float32, -bound, bound)
    b = jax.random.uniform(kb, (1,), jnp.float32, -bound, bound)

    def check(x, **kwargs):
        out = jax.block_until_ready(labelaware_forward(x, w, b, **kwargs))
        ref = labelaware_reference(x, w, b)
        assert out.shape == ref.shape, (out.shape, ref.shape)
        assert jnp.allclose(out, ref, atol=1e-5, rtol=1e-5), (out, ref)

    # 1) Small shapes -> fused grid-less path.
    x1 = jax.random.normal(kx, (2, 16, 32), dtype=jnp.float32)
    check(x1)

    # 2) Tiled path: ragged L (300 % 256 != 0), multiple row tiles and L tiles.
    x2 = jax.random.normal(k2, (2, 32, 300), dtype=jnp.float32)
    check(x2, force_tiled=True, target_block_bytes=8 * 1024)

    # 3) Tiled path: L < 128 (full-L blocks) and ragged rows (R=36, TR=8).
    x3 = jax.random.normal(k3, (3, 12, 100), dtype=jnp.float32)
    check(x3, force_tiled=True, target_block_bytes=4 * 1024)

    # 4) Tiled path with default byte-targeted sizing (row-split for megacore,
    #    128 lane-chunks per step).
    x4 = jax.random.normal(k4, (2, 16, 16384), dtype=jnp.float32)
    check(x4, force_tiled=True)

    print("KERNEL_OK")
</pallas_src>

<mosaic_0001>
module attributes {stable_mosaic.version = 11 : i64} {
  func.func @_small_kernel(%arg0: memref<3xf32, #tpu.memory_space<smem>>, %arg1: memref<1xf32, #tpu.memory_space<smem>>, %arg2: memref<2x16x32xf32, #tpu.memory_space<vmem>>, %arg3: memref<2x16xf32, #tpu.memory_space<vmem>>) attributes {dimension_semantics = [], scalar_prefetch = 0 : i64, scratch_operands = 0 : i64, tpu.core_type = #tpu.core_type<tc>} {
    %c0 = arith.constant 0 : index
    %c0_0 = arith.constant 0 : index
    %c0_1 = arith.constant 0 : index
    %0 = vector.load %arg2[%c0, %c0_0, %c0_1] : memref<2x16x32xf32, #tpu.memory_space<vmem>>, vector<2x16x32xf32>
    %cst = arith.constant dense<0.000000e+00> : vector<2x16xf32>
    %1 = vector.multi_reduction <add>, %0, %cst [2] : vector<2x16x32xf32> to vector<2x16xf32>
    %cst_2 = arith.constant 3.200000e+01 : f32
    %2 = vector.broadcast %cst_2 : f32 to vector<2x16xf32>
    %3 = arith.divf %1, %2 : vector<2x16xf32>
    %4 = tpu.iota {dimensions = array<i32: 1>} : vector<2x16xi32>
    %c0_i32 = arith.constant 0 : i32
    %5 = vector.broadcast %c0_i32 : i32 to vector<2x16xi32>
    %6 = arith.cmpi eq, %4, %5 : vector<2x16xi32>
    %c1_i32 = arith.constant 1 : i32
    %7 = tpu.dynamic_rotate %3 by %c1_i32 dim 1 : vector<2x16xf32>, i32 -> vector<2x16xf32>
    %cst_3 = arith.constant 0.000000e+00 : f32
    %8 = vector.broadcast %cst_3 : f32 to vector<2x16xf32>
    %9 = arith.select %6, %8, %7 : vector<2x16xi1>, vector<2x16xf32>
    %c15_i32 = arith.constant 15 : i32
    %10 = vector.broadcast %c15_i32 : i32 to vector<2x16xi32>
    %11 = arith.cmpi eq, %4, %10 : vector<2x16xi32>
    %c15_i32_4 = arith.constant 15 : i32
    %12 = tpu.dynamic_rotate %3 by %c15_i32_4 dim 1 : vector<2x16xf32>, i32 -> vector<2x16xf32>
    %cst_5 = arith.constant 0.000000e+00 : f32
    %13 = vector.broadcast %cst_5 : f32 to vector<2x16xf32>
    %14 = arith.select %11, %13, %12 : vector<2x16xi1>, vector<2x16xf32>
    %c0_6 = arith.constant 0 : index
    %15 = memref.load %arg0[%c0_6] : memref<3xf32, #tpu.memory_space<smem>>
    %16 = vector.broadcast %15 : f32 to vector<2x16xf32>
    %17 = arith.mulf %16, %9 : vector<2x16xf32>
    %c1 = arith.constant 1 : index
    %18 = memref.load %arg0[%c1] : memref<3xf32, #tpu.memory_space<smem>>
    %19 = vector.broadcast %18 : f32 to vector<2x16xf32>
    %20 = arith.mulf %19, %3 : vector<2x16xf32>
    %21 = arith.addf %17, %20 : vector<2x16xf32>
    %c2 = arith.constant 2 : index
    %22 = memref.load %arg0[%c2] : memref<3xf32, #tpu.memory_space<smem>>
    %23 = vector.broadcast %22 : f32 to vector<2x16xf32>
    %24 = arith.mulf %23, %14 : vector<2x16xf32>
    %25 = arith.addf %21, %24 : vector<2x16xf32>
    %c0_7 = arith.constant 0 : index
    %26 = memref.load %arg1[%c0_7] : memref<1xf32, #tpu.memory_space<smem>>
    %27 = vector.broadcast %26 : f32 to vector<2x16xf32>
    %28 = arith.addf %25, %27 : vector<2x16xf32>
    %29 = arith.negf %28 : vector<2x16xf32>
    %30 = math.exp %29 : vector<2x16xf32>
    %cst_8 = arith.constant 1.000000e+00 : f32
    %31 = vector.broadcast %cst_8 : f32 to vector<2x16xf32>
    %32 = arith.addf %31, %30 : vector<2x16xf32>
    %33 = arith.divf %31, %32 : vector<2x16xf32>
    %c0_9 = arith.constant 0 : index
    %c0_10 = arith.constant 0 : index
    %34 = vector.load %arg3[%c0_9, %c0_10] : memref<2x16xf32, #tpu.memory_space<vmem>>, vector<2x16xf32>
    tpu.vector_store %arg3[%c0_9, %c0_10], %33 {strides = array<i32>} : memref<2x16xf32, #tpu.memory_space<vmem>>, vector<2x16xf32>,
    return
  }
}

</mosaic_0001>

<llo_original>
// kernel: tpu_custom_call.1
$region0: #{tpu_custom_call.1}
  #allocation0 [shape = 'u32[]', space=smem, size = 0x4, offset = 0x4, fixed_abs, tag = 'smem constant byte address 0x4 - core index']
  #allocation1 [shape = 'u32[72,128]{1,0:T(1,128)}', space=vmem, size = 0x9000, scoped, tag = 'internal scratch']
  #allocation2 [shape = 'f32[1]{0:T(128)S(6)}', space=smem, size = 0x200, scoped, tag = 'scoped memory for tpu_custom_call.1']
  %s0 = inlined_call_operand.vmem [shape: f32[3], index: 0, kind: input, shape index: {}]
  %s1 = inlined_call_operand.<no memory space> [shape: f32[1], index: 1, kind: input, shape index: {}]
  %s2 = inlined_call_operand.hbm [shape: f32[2,16,32], index: 2, kind: input, shape index: {}]
  %s3 = inlined_call_operand.hbm [shape: f32[2,16], index: 3, kind: output, shape index: {}]
  %s4 = sld [smem:[#allocation0]]
  $region30: #{tpu_custom_call.1} parent=0
    _
  %s6 = ssub.s32 1, %s4
  %s7 = scalar_select 0, %s6, %s4
  %8 = sst [smem:[#allocation2]] %s1
  $region1: #{tpu_custom_call.1} parent=0
    #allocation3 [shape = 'u8[512]{0}', space=smem, size = 0x200, scoped, tag = 'input window, operand 0, single buffered']
    #allocation4 [shape = 's32[1]{0}', space=sflag, size = 0x4, scoped, tag = 'scoped memory for tpu_custom_call.1']
    #allocation5 [shape = 's32[1]{0}', space=sflag, size = 0x4, scoped, tag = 'scoped memory for tpu_custom_call.1']
    #allocation6 [shape = 's32[1]{0}', space=sflag, size = 0x4, scoped, tag = 'scoped memory for tpu_custom_call.1']
    #allocation7 [shape = 'u8[16384]{0}', space=vmem, size = 0x4000, scoped, tag = 'input window, operand 2, single buffered']
    #allocation8 [shape = 'u8[1024]{0}', space=vmem, size = 0x400, scoped, tag = 'output window, operand 0, single buffered']
    %9 = vsyncpa [#allocation6], 0
    %10 = vsyncpa [#allocation4], 0
    %11 = vsyncpa [#allocation5], 0
    // Predicated region
    $region2: #{tpu_custom_call.1} parent=1 // pred_check
      _
    $region3: #{tpu_custom_call.1} parent=1 // pred_check_branch
      %13 = sbr.rel (0) target = $region5
    $region4: #{tpu_custom_call.1} parent=1 // pred_region
      %15 = vsyncadd [#allocation6], 0
      %s17 = sshll.u32 %s0, 4
      %s18 = int_to_ptr.vmem [resolvable:$true] %s17
      %20 = dma.vmem_to_smem %s18, 16, [#allocation3], [#allocation6]
    $region5: #{tpu_custom_call.1} parent=1 // pred_fallthru
      _
    // Predicated region
    $region6: #{tpu_custom_call.1} parent=1 // pred_check
      _
    $region7: #{tpu_custom_call.1} parent=1 // pred_check_branch
      %22 = sbr.rel (0) target = $region9
    $region8: #{tpu_custom_call.1} parent=1 // pred_region
      _
    $region9: #{tpu_custom_call.1} parent=1 // pred_fallthru
      _
    // Predicated region
    $region10: #{tpu_custom_call.1} parent=1 // pred_check
      _
    $region11: #{tpu_custom_call.1} parent=1 // pred_check_branch
      %24 = sbr.rel (0) target = $region13
    $region12: #{tpu_custom_call.1} parent=1 // pred_region
      %26 = vsyncadd [#allocation4], 0
      %s27 = sshll.u32 %s2, 4
      %s28 = int_to_ptr.hbm [resolvable:$true] %s27
      %s29 = sshll.u32 [#allocation7], 4
      %s30 = int_to_ptr.vmem [resolvable:$true] %s29
      %35 = dma.hbm_to_vmem [thread:$0]  %s28, 512, %s30, [#allocation4], 128, 128, 8
    $region13: #{tpu_custom_call.1} parent=1 // pred_fallthru
      _
    // Predicated region
    $region14: #{tpu_custom_call.1} parent=1 // pred_check
      _
    $region15: #{tpu_custom_call.1} parent=1 // pred_check_branch
      %37 = sbr.rel (0) target = $region17
    $region16: #{tpu_custom_call.1} parent=1 // pred_region
      %39 = dma.done [#allocation6], 16
    $region17: #{tpu_custom_call.1} parent=1 // pred_fallthru
      _
    // Predicated region
    $region18: #{tpu_custom_call.1} parent=1 // pred_check
      _
    $region19: #{tpu_custom_call.1} parent=1 // pred_check_branch
      %41 = sbr.rel (0) target = $region21
    $region20: #{tpu_custom_call.1} parent=1 // pred_region
      %43 = dma.done [#allocation4], 512
    $region21: #{tpu_custom_call.1} parent=1 // pred_fallthru
      _
    %44 = sfence
    %v45 = vld [vmem:[#allocation7] sm:$0xff]
    %v46 = vld [vmem:[#allocation7 + $0x8] sm:$0xff]
    %v47 = vld [vmem:[#allocation7 + $0x10] sm:$0xff]
    %v48 = vld [vmem:[#allocation7 + $0x18] sm:$0xff]
    %vm49 = vcmask 261120
    %v50 = vsel %vm49, %v45, 0.0
    %51 = vadd.xlane.f32.xlu0 %v50
    %v52 = vpop.xlane.xlu0 %51
    %v53 = vsel %vm49, %v46, 0.0
    %54 = vadd.xlane.f32.xlu0 %v53
    %v55 = vpop.xlane.xlu0 %54
    %v56 = vsel %vm49, %v47, 0.0
    %57 = vadd.xlane.f32.xlu0 %v56
    %v58 = vpop.xlane.xlu0 %57
    %v59 = vsel %vm49, %v48, 0.0
    %60 = vadd.xlane.f32.xlu0 %v59
    %v61 = vpop.xlane.xlu0 %60
    %v62 = vrcp.pop 32.0
    %v63 = vmul.f32 32.0, %v62
    %v64 = vsub.f32 1.0, %v63
    %v65 = vmul.f32 %v62, %v64
    %v66 = vadd.f32 %v62, %v65
    %vm67 = vweird.f32 %v62
    %v68 = vsel %vm67, %v62, %v66
    %v69 = vmul.f32 %v52, %v68
    %v70 = vmul.f32 %v55, %v68
    %v71 = vmul.f32 %v58, %v68
    %v72 = vmul.f32 %v61, %v68
    %v73 = vlaneseq
    %v74 = vand.u32 %v73, 127
    %vm75 = vcmp.eq.s32.totalorder %v74, 0
    %v80 = vperm.slane %v69, %v74
    %v81 = vadd.s32 %v74, 4294967288
    %v82 = vperm.slane %v70, %v81
    %vm83 = vcmask 130112
    %v84 = vsel %vm83, %v82, %v80
    %v85 = vperm.slane %v71, %v74
    %v86 = vperm.slane %v72, %v81
    %v87 = vsel %vm83, %v86, %v85
    %vm88 = vcmask 1041409
    %v89 = vsel %vm88, %v87, %v84
    %vm91 = vcmask 1047680
    %92 = vrot.lane.b32.xlu0 %v89, 16
    %v93 = vpop.permute.xlu0 %92
    %v94 = vsel %vm91, %v93, %v89
    %95 = vrot.lane.b32.xlu0 %v94, 16
    %v96 = vpop.permute.xlu0 %95
    %v97 = vsel %vm91, %v96, %v89
    %99 = vrot.lane.b32.xlu0 %v97, 113
    %v100 = vpop.permute.xlu0 %99
    %v102 = vsel %vm75, 0.0, %v100
    %vm103 = vcmp.eq.s32.totalorder %v74, 15
    %104 = vrot.lane.b32.xlu0 %v97, 127
    %v105 = vpop.permute.xlu0 %104
    %v107 = vsel %vm103, 0.0, %v105
    %s108 = sld [smem:[#allocation3]]
    %v109 = vstv %s108
    %v110 = vmul.f32 %v109, %v102
    %s111 = sld [smem:[#allocation3 + $0x1]]
    %v112 = vstv %s111
    %v113 = vmul.f32 %v112, %v69
    %v114 = vmul.f32 %v112, %v70
    %v115 = vmul.f32 %v112, %v71
    %v116 = vmul.f32 %v112, %v72
    %v121 = vperm.slane %v113, %v74
    %v122 = vperm.slane %v114, %v81
    %v123 = vsel %vm83, %v122, %v121
    %v124 = vperm.slane %v115, %v74
    %v125 = vperm.slane %v116, %v81
    %v126 = vsel %vm83, %v125, %v124
    %v127 = vsel %vm88, %v126, %v123
    %v129 = vadd.f32 %v110, %v127
    %s130 = sld [smem:[#allocation3 + $0x2]]
    %v131 = vstv %s130
    %v132 = vmul.f32 %v131, %v107
    %v133 = vadd.f32 %v129, %v132
    %s134 = sld [smem:[#allocation2]]
    %v135 = vstv %s134
    %v136 = vadd.f32 %v133, %v135
    %v137 = vxor.u32 %v136, 2147483648
    %v138 = vmul.f32 %v137, 1.442695
    %v139 = vpow.pop %v138
    %v140 = vadd.f32 %v139, 1.0
    %v141 = vrcp.pop %v140
    %v142 = vmul.f32 %v140, %v141
    %v143 = vsub.f32 1.0, %v142
    %v144 = vmul.f32 %v141, %v143
    %v145 = vadd.f32 %v141, %v144
    %vm146 = vweird.f32 %v140
    %vm147 = vweird.f32 %v141
    %vm148 = vmor %vm146, %vm147
    %v149 = vsel %vm148, %v141, %v145
    %v150 = vand.u32 2147483647, %v140
    %vm151 = vcmp.eq.f32.partialorder %v150, 8.507059e+37
    %v152 = vand.u32 %v140, 2147483648
    %v153 = vor.u32 1.1754944e-38, %v152
    %v154 = vsel %vm151, %v153, %v149
    %v155 = vmul.f32 1.0, %v154
    %vm156 = vcmask 123904
    %157 = vst.msk [vmem:[#allocation8] sm:$0x3] %vm156, %v155
    // Predicated region
    $region22: #{tpu_custom_call.1} parent=1 // pred_check
      _
    $region23: #{tpu_custom_call.1} parent=1 // pred_check_branch
      %159 = sbr.rel (0) target = $region25
    $region24: #{tpu_custom_call.1} parent=1 // pred_region
      %161 = vsyncadd [#allocation5], 0
      %s163 = sshll.u32 [#allocation8], 4
      %s164 = int_to_ptr.vmem [resolvable:$true] %s163
      %s165 = sshll.u32 %s3, 4
      %s166 = int_to_ptr.hbm [resolvable:$true] %s165
      %168 = dma.vmem_to_hbm [thread:$0]  %s164, 32, %s166, [#allocation5]
    $region25: #{tpu_custom_call.1} parent=1 // pred_fallthru
      _
    // Predicated region
    $region26: #{tpu_custom_call.1} parent=1 // pred_check
      _
    $region27: #{tpu_custom_call.1} parent=1 // pred_check_branch
      %170 = sbr.rel (0) target = $region29
    $region28: #{tpu_custom_call.1} parent=1 // pred_region
      %172 = dma.done [#allocation5], 32
    $region29: #{tpu_custom_call.1} parent=1 // pred_fallthru
      _
    %173 = vsyncpa [#allocation4], 1
    %174 = vsyncpa [#allocation5], 1
    %175 = vsyncpa [#allocation6], 1

</llo_original>
